<compile_context>
chip_gen: v6e
topology: v6e:2x2x1
jax: 0.10.0
libtpu: 0.0.40
codegen_flags: <defaults>
</compile_context>

<pallas_src>
import functools

import jax
import jax.numpy as jnp
from jax.experimental import pallas as pl
from jax.experimental.pallas import tpu as pltpu


# -----------------------------------------------------------------------------
# Primary (zero-copy) path: reshape is metadata, kernel is an aliased no-op.
# -----------------------------------------------------------------------------
def _aliased_noop_kernel(x_hbm_ref, o_hbm_ref, flag_smem):
    # The output buffer *is* the input buffer (input_output_aliases={0: 0}) and
    # the reshape itself is pure metadata, so there are no bytes to move.
    # Touch a 1-word SMEM scratch so the kernel body is non-trivial.
    del x_hbm_ref, o_hbm_ref
    flag_smem[0] = jnp.int32(1)


@jax.jit
def identity1_forward(data):
    """Equivalent of Identity1.forward: data.view(3, final // 3)."""
    batch = data.shape[0]
    final = data.size // batch
    out_cols = final // 3
    # torch .view only requires the reshape to be size-preserving (this also
    # admits some batch > 1 shapes, exactly like the original module).
    assert data.size == 3 * out_cols, "view(3, final // 3) is not size-preserving"

    x2d = data.reshape(3, out_cols)  # metadata-only (row-major, contiguous)

    return pl.pallas_call(
        _aliased_noop_kernel,
        out_shape=jax.ShapeDtypeStruct((3, out_cols), x2d.dtype),
        in_specs=[pl.BlockSpec(memory_space=pl.ANY)],   # raw HBM ref, no auto-DMA
        out_specs=pl.BlockSpec(memory_space=pl.ANY),    # raw HBM ref, no auto-DMA
        scratch_shapes=[pltpu.SMEM((1,), jnp.int32)],
        input_output_aliases={0: 0},                    # output buffer == input buffer
    )(x2d)


# -----------------------------------------------------------------------------
# Secondary path: lane/sublane-dense, grid-tiled copy (template for when a
# freshly materialized buffer is actually required).
# -----------------------------------------------------------------------------
def _copy_block_kernel(x_ref, o_ref):
    o_ref[...] = x_ref[...]


def _dense_staging_layout(n, itemsize, block_rows=None):
    """Pick (rows, cols, block_rows): cols % 128 == 0, row blocks multiples of 8
    (or full-extent), each block kept <= ~2 MiB so in+out double-buffering fits
    the default scoped VMEM on v5e/v6e/v7x."""
    for cols in (1024, 512, 256, 128):
        if n % cols:
            continue
        rows = n // cols
        if (block_rows is not None and rows % block_rows == 0
                and (block_rows % 8 == 0 or block_rows == rows)):
            return rows, cols, block_rows
        budget_rows = (2 * 1024 * 1024) // (cols * itemsize)
        br = rows  # full-extent fallback block (always a legal block shape)
        for cand in range(min(rows, budget_rows) // 8 * 8, 0, -8):
            if rows % cand == 0:
                br = cand
                break
        return rows, cols, br
    return None


@functools.partial(jax.jit, static_argnames=("block_rows",))
def identity1_forward_materialized(data, *, block_rows=None):
    """Same semantics as identity1_forward, but produces an independent output
    buffer via a lane/sublane-dense, pipelined tiled copy."""
    batch = data.shape[0]
    final = data.size // batch
    out_cols = final // 3
    assert data.size == 3 * out_cols, "view(3, final // 3) is not size-preserving"

    layout = _dense_staging_layout(data.size, data.dtype.itemsize, block_rows)
    if layout is None:
        # Awkward sizes (numel not divisible by 128): single full-extent block.
        rows, cols, br = 3, out_cols, 3
    else:
        rows, cols, br = layout

    x2d = data.reshape(rows, cols)      # metadata-only dense staging layout
    out = pl.pallas_call(
        _copy_block_kernel,
        out_shape=jax.ShapeDtypeStruct((rows, cols), x2d.dtype),
        grid=(rows // br,),
        in_specs=[pl.BlockSpec((br, cols), lambda i: (i, 0))],
        out_specs=pl.BlockSpec((br, cols), lambda i: (i, 0)),
        compiler_params=pltpu.CompilerParams(
            dimension_semantics=("parallel",)),
    )(x2d)
    return out.reshape(3, out_cols)     # metadata-only


if __name__ == "__main__":
    key = jax.random.PRNGKey(0)

    # NOTE: Identity1.__init__ also declares nn.Linear(150528, 1) and
    # nn.Linear(50176, 1); they are never used in forward, so they are not built.

    # Small NCHW input consistent with the forward's view constraint:
    # batch=1, channels=3, spatial=16 -> numel=768 -> output (3, 256).
    x = jax.random.normal(key, (1, 3, 16, 16), jnp.float32)
    out = jax.block_until_ready(identity1_forward(x))
    ref = x.reshape(3, x.size // 3)
    assert out.shape == (3, 256), out.shape
    assert bool(jnp.array_equal(out, ref)), "zero-copy path mismatch vs reshape ref"

    # Exercise the dense tiled-copy template on a slightly larger (still small)
    # input so the grid has several parallel steps: (1, 3, 64, 128) -> 24576
    # elements, staged as (24, 1024) and copied in 3 blocks of (8, 1024).
    x2 = jax.random.normal(jax.random.PRNGKey(1), (1, 3, 64, 128), jnp.float32)
    out2 = jax.block_until_ready(identity1_forward_materialized(x2, block_rows=8))
    ref2 = x2.reshape(3, x2.size // 3)
    assert out2.shape == (3, 8192), out2.shape
    assert bool(jnp.array_equal(out2, ref2)), "tiled-copy path mismatch vs reshape ref"

    print("KERNEL_OK")
</pallas_src>

<mosaic_0001>
module attributes {stable_mosaic.version = 11 : i64} {
  func.func @_aliased_noop_kernel(%arg0: memref<3x256xf32, #tpu.memory_space<any>>, %arg1: memref<3x256xf32, #tpu.memory_space<any>>, %arg2: memref<1xi32, #tpu.memory_space<smem>>) attributes {dimension_semantics = [], scalar_prefetch = 0 : i64, scratch_operands = 1 : i64, tpu.core_type = #tpu.core_type<tc>} {
    %c1_i32 = arith.constant 1 : i32
    %c0 = arith.constant 0 : index
    %0 = memref.load %arg2[%c0] : memref<1xi32, #tpu.memory_space<smem>>
    memref.store %c1_i32, %arg2[%c0] : memref<1xi32, #tpu.memory_space<smem>>
    return
  }
}

</mosaic_0001>

<llo_original>
// kernel: identity1_forward.1
$region0: #{identity1_forward.1}
  #allocation0 [shape = 'u32[]', space=smem, size = 0x4, offset = 0x4, fixed_abs, tag = 'smem constant byte address 0x4 - core index']
  #allocation1 [shape = 'u32[144,128]{1,0:T(1,128)}', space=vmem, size = 0x12000, scoped, tag = 'internal scratch']
  #allocation2 [shape = 's32[1]{0:T(128)}', space=smem, size = 0x200, scoped, tag = 'scratch operand']
  %s0 = inlined_call_operand.hbm [shape: f32[3,256], index: 0, kind: input, shape index: {}, may-alias: {0,1}]
  %s1 = inlined_call_operand.hbm [shape: f32[3,256], index: 1, kind: output, shape index: {}, may-alias: {0,1}]
  %s2 = sld [smem:[#allocation0]]
  $region2: #{identity1_forward.1} parent=0
    _
  %s4 = ssub.s32 1, %s2
  %s5 = scalar_select 0, %s4, %s2
  %s6 = scalar_lea.smem [#allocation2], 0
  %7 = sst [smem:[%s6]] 1

</llo_original>
